<compile_context>
chip_gen: v7x
topology: tpu7x:2x2x1
jax: 0.10.0
libtpu: 0.0.40
codegen_flags: <defaults>
</compile_context>

<pallas_src>
import math

import jax
import jax.numpy as jnp
from jax.experimental import pallas as pl
from jax.experimental.pallas import tpu as pltpu


HALF_LOG_2PI = 0.5 * math.log(2.0 * math.pi)


def _round_up(x, m):
    return ((x + m - 1) // m) * m


def _policy_kernel(x_ref,       # (S, TB)    x, batch on lanes
                   w1_ref,      # (H, S)     fc1.weight
                   b1_ref,      # (H, 1)     fc1.bias
                   wh_ref,      # (2A, H)    [mu_head.weight ; log_std_head.weight]
                   bh_ref,      # (2A, 1)    [mu_head.bias   ; log_std_head.bias]
                   eps_ref,     # (A, TB)    N(0,1) noise for rsample
                   scale_ref,   # (A, 1)
                   offset_ref,  # (A, 1)
                   out_ref):    # (2A, TB)   rows [:A]=scaled_action, [A:]=log_prob
    A = eps_ref.shape[0]

    # fc1 + relu : (H, S) @ (S, TB) -> (H, TB), f32 accumulate on the MXU.
    h = jnp.dot(w1_ref[...], x_ref[...], preferred_element_type=jnp.float32)
    h = jnp.maximum(h + b1_ref[...], 0.0)

    # Fused mu / log_std heads: a single (2A, H) @ (H, TB) matmul.
    hz = jnp.dot(wh_ref[...], h.astype(wh_ref.dtype),
                 preferred_element_type=jnp.float32) + bh_ref[...]
    mu = jnp.tanh(hz[:A, :])
    log_std = jnp.clip(hz[A:, :], -5.0, 2.0)
    std = jnp.log1p(jnp.exp(log_std)) + 1e-6         # softplus + 1e-6 (log_std <= 2)

    # rsample: u = mu + std * eps.  (u - mu)/std == eps exactly -> no divide
    # inside Normal.log_prob.
    eps = eps_ref[...].astype(jnp.float32)
    u = mu + std * eps
    action = jnp.tanh(u)

    # log_prob = N(mu,std).log_prob(u) - log(1 - tanh(u)^2 + 1e-6)
    # (same +1e-6 clamp as the PyTorch module).
    log_prob = (-0.5 * eps * eps - jnp.log(std) - HALF_LOG_2PI) \
               - jnp.log(1.0 - action * action + 1e-6)

    # Per-action affine rescale: (action + 1) * scale + offset.
    scaled_action = (action + 1.0) * scale_ref[...] + offset_ref[...]

    # Write the two halves directly (no sublane concatenate, no extra temp).
    out_ref[:A, :] = scaled_action
    out_ref[A:, :] = log_prob


def _choose_tiling(B, *, cap=8192, lane=128):
    """Pick the tile from the grid, not the grid from the tile.

    grid = cdiv(B, cap); block_b = round_up(cdiv(B, grid), 128) caps padding
    waste at <=127 lanes per tile.  For mid-size batches force grid >= 2 (and
    keep it even) so ("parallel",) can shard across both v7x TensorCores.
    """
    grid_n = max(1, pl.cdiv(B, cap))
    if grid_n == 1 and B > 4 * lane:
        grid_n = 2
    if grid_n > 1 and grid_n % 2:
        grid_n += 1
    block_b = _round_up(pl.cdiv(B, grid_n), lane)
    return grid_n, block_b


def policy_net_continuous_forward(x, params, eps_t, *, block_cap=8192, use_bf16=True):
    """x: (B, state_dim) f32; eps_t: (action_dim, B) N(0,1) noise (batch on lanes,
    bf16 or f32).  Returns (scaled_action, log_prob), each (B, action_dim) f32."""
    B, S = x.shape
    H = params["w1"].shape[0]
    A = params["scale"].shape[0]
    assert params["w_heads"].shape == (2 * A, H)
    assert eps_t.shape == (A, B)

    w1, wh = params["w1"], params["w_heads"]
    x_t = x.T                                    # (S, B): batch on the lane axis
    if use_bf16:
        # bf16 MXU operands (f32 accumulate); eps kept bf16 to halve its DMA.
        x_t = x_t.astype(jnp.bfloat16)           # fuses with the transpose in XLA
        w1 = w1.astype(jnp.bfloat16)
        wh = wh.astype(jnp.bfloat16)
        eps_t = eps_t.astype(jnp.bfloat16)

    grid_n, block_b = _choose_tiling(B, cap=block_cap)
    Bp = grid_n * block_b
    if Bp != B:
        x_t = jnp.pad(x_t, ((0, 0), (0, Bp - B)))
        eps_t = jnp.pad(eps_t, ((0, 0), (0, Bp - B)))

    tile = lambda i: (0, i)    # batch-tiled operands (double-buffer pipelined)
    const = lambda i: (0, 0)   # weights/biases: VMEM-resident across grid steps

    io_bytes = 2 if use_bf16 else 4
    # Explicit VMEM budget: double-buffered tiles + weights + live f32
    # temporaries (h plus ~a dozen (A..2A, block_b) arrays), with ~2x headroom.
    # Keep >= the 32 MiB v6e/v7x scoped default, but below v7x's 64 MiB physical.
    io = 2 * ((S + A) * block_b * io_bytes + 2 * A * block_b * 4)
    wgt = (H * S + 2 * A * H) * io_bytes + (H + 4 * A) * 4
    tmp = (2 * H + 16 * 2 * A) * block_b * 4
    vmem_limit = int(min(max(2 * (io + wgt + tmp), 32 << 20), 56 << 20))

    # Kernel is HBM/overhead-bound (AI ~19 FLOP/byte); the estimate just lets
    # XLA schedule the surrounding ops sensibly.
    cost = pl.CostEstimate(
        flops=2 * Bp * (S * H + H * 2 * A) + 30 * Bp * A,
        transcendentals=6 * Bp * A,
        bytes_accessed=(S + A) * Bp * io_bytes + 2 * A * Bp * 4 + wgt,
    )

    out = pl.pallas_call(
        _policy_kernel,
        out_shape=jax.ShapeDtypeStruct((2 * A, Bp), jnp.float32),
        grid=(grid_n,),
        in_specs=[
            pl.BlockSpec((S, block_b), tile),        # x_t
            pl.BlockSpec((H, S), const),             # fc1.weight
            pl.BlockSpec((H, 1), const),             # fc1.bias
            pl.BlockSpec((2 * A, H), const),         # fused head weights
            pl.BlockSpec((2 * A, 1), const),         # fused head biases
            pl.BlockSpec((A, block_b), tile),        # eps_t
            pl.BlockSpec((A, 1), const),             # scale
            pl.BlockSpec((A, 1), const),             # offset
        ],
        out_specs=pl.BlockSpec((2 * A, block_b), tile),
        compiler_params=pltpu.CompilerParams(
            dimension_semantics=("parallel",),       # batch axis -> both v7x TCs
            vmem_limit_bytes=vmem_limit),
        cost_estimate=cost,
    )(x_t, w1, params["b1"], wh, params["b_heads"], eps_t,
      params["scale"], params["offset"])

    # Single transpose of the packed slab, then a column split (one HBM pass).
    out_bt = out[:, :B].T                            # (B, 2A)
    return out_bt[:, :A], out_bt[:, A:]


def init_params(key, state_dim, hidden_dim, action_dim):
    """Deterministic synthetic init mirroring the PyTorch module's __init__.

    Weights kept in native PyTorch (out_features, in_features) layout — exactly
    what the batch-on-lanes kernel wants.
    """
    assert action_dim == 4, "the module's affine rescale is hard-wired to 4 actions"
    k1, k2, k3, k4 = jax.random.split(key, 4)

    # fc1: PyTorch default Linear init = U(-1/sqrt(in), 1/sqrt(in))
    bound1 = 1.0 / math.sqrt(state_dim)
    w1 = jax.random.uniform(k1, (hidden_dim, state_dim), jnp.float32, -bound1, bound1)
    b1 = jax.random.uniform(k2, (hidden_dim, 1), jnp.float32, -bound1, bound1)

    # mu_head / log_std_head: weights U(-0.01, 0.01), bias 0 / -1 — fused (2A, H).
    w_mu = jax.random.uniform(k3, (action_dim, hidden_dim), jnp.float32, -0.01, 0.01)
    w_ls = jax.random.uniform(k4, (action_dim, hidden_dim), jnp.float32, -0.01, 0.01)
    b_mu = jnp.zeros((action_dim, 1), jnp.float32)
    b_ls = jnp.full((action_dim, 1), -1.0, jnp.float32)
    w_heads = jnp.concatenate([w_mu, w_ls], axis=0)    # (2A, H)
    b_heads = jnp.concatenate([b_mu, b_ls], axis=0)    # (2A, 1)

    # column-wise action rescale:
    #   M_b=(a0+1)*25   B_b=(a1+1)*12.5+5   w_b=(a2+1)*12.5+5   R_b=(a3+1)*15+10
    scale = jnp.array([[25.0], [12.5], [12.5], [15.0]], jnp.float32)
    offset = jnp.array([[0.0], [5.0], [5.0], [10.0]], jnp.float32)

    return dict(w1=w1, b1=b1, w_heads=w_heads, b_heads=b_heads,
                scale=scale, offset=offset)


def _reference_forward(x, params, eps):
    """Pure-JAX f32 mirror of the PyTorch forward (sanity check only)."""
    A = params["scale"].shape[0]
    h = jnp.maximum(x @ params["w1"].T + params["b1"][:, 0], 0.0)
    z = h @ params["w_heads"].T + params["b_heads"][:, 0]
    mu = jnp.tanh(z[:, :A])
    log_std = jnp.clip(z[:, A:], -5.0, 2.0)
    std = jax.nn.softplus(log_std) + 1e-6
    u = mu + std * eps
    action = jnp.tanh(u)
    log_prob = -0.5 * ((u - mu) / std) ** 2 - jnp.log(std) - HALF_LOG_2PI
    log_prob = log_prob - jnp.log(1.0 - action ** 2 + 1e-6)
    scaled = (action + 1.0) * params["scale"][:, 0] + params["offset"][:, 0]
    return scaled, log_prob


if __name__ == "__main__":
    state_dim, hidden_dim, action_dim = 16, 32, 4
    batch = 8

    key = jax.random.PRNGKey(0)
    k_params, k_x, k_eps = jax.random.split(key, 3)

    params = init_params(k_params, state_dim, hidden_dim, action_dim)
    x = jax.random.normal(k_x, (batch, state_dim), jnp.float32)
    # Noise generated already batch-on-lanes and in bf16 (no wrapper transpose
    # or downcast pass); the reference uses the same (upcast) values.
    eps_t = jax.random.normal(k_eps, (action_dim, batch), jnp.bfloat16)
    eps_f32 = eps_t.astype(jnp.float32).T            # (B, A) for the reference

    # bf16 MXU path (production default).
    scaled_action, log_prob = policy_net_continuous_forward(x, params, eps_t)
    jax.block_until_ready((scaled_action, log_prob))

    assert scaled_action.shape == (batch, action_dim)
    assert log_prob.shape == (batch, action_dim)
    assert bool(jnp.all(jnp.isfinite(scaled_action)))
    assert bool(jnp.all(jnp.isfinite(log_prob)))

    sa_ref, lp_ref = _reference_forward(x, params, eps_f32)
    # bf16 MXU operands introduce small, bounded deviations -> loose smoke test.
    assert bool(jnp.allclose(scaled_action, sa_ref, atol=0.5, rtol=0.05))
    assert bool(jnp.allclose(log_prob, lp_ref, atol=0.2, rtol=0.05))

    # Full-f32 path for a tighter numerical check of the kernel math.
    sa32, lp32 = policy_net_continuous_forward(
        x, params, eps_t.astype(jnp.float32), use_bf16=False)
    jax.block_until_ready((sa32, lp32))
    assert bool(jnp.allclose(sa32, sa_ref, atol=5e-3, rtol=1e-3))
    assert bool(jnp.allclose(lp32, lp_ref, atol=5e-3, rtol=1e-3))

    print("KERNEL_OK")
</pallas_src>

<mosaic_0001>
module attributes {stable_mosaic.version = 11 : i64} {
  func.func @_policy_kernel(%arg0: i32, %arg1: memref<16x128xbf16, #tpu.memory_space<vmem>>, %arg2: memref<32x16xbf16, #tpu.memory_space<vmem>>, %arg3: memref<32x1xf32, #tpu.memory_space<vmem>>, %arg4: memref<8x32xbf16, #tpu.memory_space<vmem>>, %arg5: memref<8x1xf32, #tpu.memory_space<vmem>>, %arg6: memref<4x128xbf16, #tpu.memory_space<vmem>>, %arg7: memref<4x1xf32, #tpu.memory_space<vmem>>, %arg8: memref<4x1xf32, #tpu.memory_space<vmem>>, %arg9: memref<8x128xf32, #tpu.memory_space<vmem>>) attributes {dimension_semantics = [#tpu.dimension_semantics<parallel>], iteration_bounds = array<i64: 1>, scalar_prefetch = 0 : i64, scratch_operands = 0 : i64, tpu.core_type = #tpu.core_type<tc>, window_params = [{transform_indices = @transform_0, window_bounds = array<i64: 16, 128>}, {pipeline_mode = #tpu.pipeline_mode<synchronous>, transform_indices = @transform_1, window_bounds = array<i64: 32, 16>}, {pipeline_mode = #tpu.pipeline_mode<synchronous>, transform_indices = @transform_2, window_bounds = array<i64: 32, 1>}, {pipeline_mode = #tpu.pipeline_mode<synchronous>, transform_indices = @transform_3, window_bounds = array<i64: 8, 32>}, {pipeline_mode = #tpu.pipeline_mode<synchronous>, transform_indices = @transform_4, window_bounds = array<i64: 8, 1>}, {transform_indices = @transform_5, window_bounds = array<i64: 4, 128>}, {pipeline_mode = #tpu.pipeline_mode<synchronous>, transform_indices = @transform_6, window_bounds = array<i64: 4, 1>}, {pipeline_mode = #tpu.pipeline_mode<synchronous>, transform_indices = @transform_7, window_bounds = array<i64: 4, 1>}, {transform_indices = @transform_8, window_bounds = array<i64: 8, 128>}]} {
    %c0 = arith.constant 0 : index
    %c0_0 = arith.constant 0 : index
    %0 = vector.load %arg2[%c0, %c0_0] : memref<32x16xbf16, #tpu.memory_space<vmem>>, vector<32x16xbf16>
    %c0_1 = arith.constant 0 : index
    %c0_2 = arith.constant 0 : index
    %1 = vector.load %arg1[%c0_1, %c0_2] : memref<16x128xbf16, #tpu.memory_space<vmem>>, vector<16x128xbf16>
    %cst = arith.constant dense<0.000000e+00> : vector<32x128xf32>
    %2 = tpu.matmul %0, %1, %cst {dimension_numbers = #tpu.dot_dimension_numbers<[1], [0], [0], [1], [0, 0, 1, 1], [], []>} : vector<32x16xbf16>, vector<16x128xbf16>, vector<32x128xf32> -> vector<32x128xf32>
    %c0_3 = arith.constant 0 : index
    %c0_4 = arith.constant 0 : index
    %3 = vector.load %arg3[%c0_3, %c0_4] : memref<32x1xf32, #tpu.memory_space<vmem>>, vector<32x1xf32>
    %4 = vector.broadcast %3 : vector<32x1xf32> to vector<32x128xf32>
    %5 = arith.addf %2, %4 : vector<32x128xf32>
    %cst_5 = arith.constant 0.000000e+00 : f32
    %6 = vector.broadcast %cst_5 : f32 to vector<32x128xf32>
    %7 = arith.maximumf %5, %6 : vector<32x128xf32>
    %c0_6 = arith.constant 0 : index
    %c0_7 = arith.constant 0 : index
    %8 = vector.load %arg4[%c0_6, %c0_7] : memref<8x32xbf16, #tpu.memory_space<vmem>>, vector<8x32xbf16>
    %9 = arith.truncf %7 : vector<32x128xf32> to vector<32x128xbf16>
    %cst_8 = arith.constant dense<0.000000e+00> : vector<8x128xf32>
    %10 = tpu.matmul %8, %9, %cst_8 {dimension_numbers = #tpu.dot_dimension_numbers<[1], [0], [0], [1], [0, 0, 1, 1], [], []>} : vector<8x32xbf16>, vector<32x128xbf16>, vector<8x128xf32> -> vector<8x128xf32>
    %c0_9 = arith.constant 0 : index
    %c0_10 = arith.constant 0 : index
    %11 = vector.load %arg5[%c0_9, %c0_10] : memref<8x1xf32, #tpu.memory_space<vmem>>, vector<8x1xf32>
    %12 = vector.broadcast %11 : vector<8x1xf32> to vector<8x128xf32>
    %13 = arith.addf %10, %12 : vector<8x128xf32>
    %14 = vector.extract_strided_slice %13 {offsets = [0, 0], sizes = [4, 128], strides = [1, 1]} : vector<8x128xf32> to vector<4x128xf32>
    %15 = math.tanh %14 : vector<4x128xf32>
    %16 = vector.extract_strided_slice %13 {offsets = [4, 0], sizes = [4, 128], strides = [1, 1]} : vector<8x128xf32> to vector<4x128xf32>
    %cst_11 = arith.constant -5.000000e+00 : f32
    %cst_12 = arith.constant 2.000000e+00 : f32
    %17 = vector.broadcast %cst_11 : f32 to vector<4x128xf32>
    %18 = arith.maximumf %17, %16 : vector<4x128xf32>
    %19 = vector.broadcast %cst_12 : f32 to vector<4x128xf32>
    %20 = arith.minimumf %19, %18 : vector<4x128xf32>
    %21 = math.exp %20 : vector<4x128xf32>
    %22 = math.log1p %21 : vector<4x128xf32>
    %cst_13 = arith.constant 9.99999997E-7 : f32
    %23 = vector.broadcast %cst_13 : f32 to vector<4x128xf32>
    %24 = arith.addf %22, %23 : vector<4x128xf32>
    %c0_14 = arith.constant 0 : index
    %c0_15 = arith.constant 0 : index
    %25 = vector.load %arg6[%c0_14, %c0_15] : memref<4x128xbf16, #tpu.memory_space<vmem>>, vector<4x128xbf16>
    %26 = arith.extf %25 : vector<4x128xbf16> to vector<4x128xf32>
    %27 = arith.mulf %24, %26 : vector<4x128xf32>
    %28 = arith.addf %15, %27 : vector<4x128xf32>
    %29 = math.tanh %28 : vector<4x128xf32>
    %cst_16 = arith.constant -5.000000e-01 : f32
    %30 = vector.broadcast %cst_16 : f32 to vector<4x128xf32>
    %31 = arith.mulf %30, %26 : vector<4x128xf32>
    %32 = arith.mulf %31, %26 : vector<4x128xf32>
    %33 = math.log %24 : vector<4x128xf32>
    %34 = arith.subf %32, %33 : vector<4x128xf32>
    %cst_17 = arith.constant 0.918938517 : f32
    %35 = vector.broadcast %cst_17 : f32 to vector<4x128xf32>
    %36 = arith.subf %34, %35 : vector<4x128xf32>
    %37 = arith.mulf %29, %29 : vector<4x128xf32>
    %cst_18 = arith.constant 1.000000e+00 : f32
    %38 = vector.broadcast %cst_18 : f32 to vector<4x128xf32>
    %39 = arith.subf %38, %37 : vector<4x128xf32>
    %cst_19 = arith.constant 9.99999997E-7 : f32
    %40 = vector.broadcast %cst_19 : f32 to vector<4x128xf32>
    %41 = arith.addf %39, %40 : vector<4x128xf32>
    %42 = math.log %41 : vector<4x128xf32>
    %43 = arith.subf %36, %42 : vector<4x128xf32>
    %cst_20 = arith.constant 1.000000e+00 : f32
    %44 = vector.broadcast %cst_20 : f32 to vector<4x128xf32>
    %45 = arith.addf %29, %44 : vector<4x128xf32>
    %c0_21 = arith.constant 0 : index
    %c0_22 = arith.constant 0 : index
    %46 = vector.load %arg7[%c0_21, %c0_22] : memref<4x1xf32, #tpu.memory_space<vmem>>, vector<4x1xf32>
    %47 = vector.broadcast %46 : vector<4x1xf32> to vector<4x128xf32>
    %48 = arith.mulf %45, %47 : vector<4x128xf32>
    %c0_23 = arith.constant 0 : index
    %c0_24 = arith.constant 0 : index
    %49 = vector.load %arg8[%c0_23, %c0_24] : memref<4x1xf32, #tpu.memory_space<vmem>>, vector<4x1xf32>
    %50 = vector.broadcast %49 : vector<4x1xf32> to vector<4x128xf32>
    %51 = arith.addf %48, %50 : vector<4x128xf32>
    %c0_25 = arith.constant 0 : index
    %c0_26 = arith.constant 0 : index
    %52 = vector.load %arg9[%c0_25, %c0_26] : memref<8x128xf32, #tpu.memory_space<vmem>>, vector<4x128xf32>
    tpu.vector_store %arg9[%c0_25, %c0_26], %51 {strides = array<i32>} : memref<8x128xf32, #tpu.memory_space<vmem>>, vector<4x128xf32>,
    %c4 = arith.constant 4 : index
    %c0_27 = arith.constant 0 : index
    %53 = vector.load %arg9[%c4, %c0_27] : memref<8x128xf32, #tpu.memory_space<vmem>>, vector<4x128xf32>
    tpu.vector_store %arg9[%c4, %c0_27], %43 {strides = array<i32>} : memref<8x128xf32, #tpu.memory_space<vmem>>, vector<4x128xf32>,
    return
  }
  func.func @transform_0(%arg0: i32) -> (i32, i32) {
    %c0_i32 = arith.constant 0 : i32
    %c0_i32_0 = arith.constant 0 : i32
    return %c0_i32, %arg0 : i32, i32
  }
  func.func @transform_1(%arg0: i32) -> (i32, i32) {
    %c0_i32 = arith.constant 0 : i32
    %c0_i32_0 = arith.constant 0 : i32
    %c0_i32_1 = arith.constant 0 : i32
    return %c0_i32, %c0_i32_0 : i32, i32
  }
  func.func @transform_2(%arg0: i32) -> (i32, i32) {
    %c0_i32 = arith.constant 0 : i32
    %c0_i32_0 = arith.constant 0 : i32
    %c0_i32_1 = arith.constant 0 : i32
    return %c0_i32, %c0_i32_0 : i32, i32
  }
  func.func @transform_3(%arg0: i32) -> (i32, i32) {
    %c0_i32 = arith.constant 0 : i32
    %c0_i32_0 = arith.constant 0 : i32
    %c0_i32_1 = arith.constant 0 : i32
    return %c0_i32, %c0_i32_0 : i32, i32
  }
  func.func @transform_4(%arg0: i32) -> (i32, i32) {
    %c0_i32 = arith.constant 0 : i32
    %c0_i32_0 = arith.constant 0 : i32
    %c0_i32_1 = arith.constant 0 : i32
    return %c0_i32, %c0_i32_0 : i32, i32
  }
  func.func @transform_5(%arg0: i32) -> (i32, i32) {
    %c0_i32 = arith.constant 0 : i32
    %c0_i32_0 = arith.constant 0 : i32
    return %c0_i32, %arg0 : i32, i32
  }
  func.func @transform_6(%arg0: i32) -> (i32, i32) {
    %c0_i32 = arith.constant 0 : i32
    %c0_i32_0 = arith.constant 0 : i32
    %c0_i32_1 = arith.constant 0 : i32
    return %c0_i32, %c0_i32_0 : i32, i32
  }
  func.func @transform_7(%arg0: i32) -> (i32, i32) {
    %c0_i32 = arith.constant 0 : i32
    %c0_i32_0 = arith.constant 0 : i32
    %c0_i32_1 = arith.constant 0 : i32
    return %c0_i32, %c0_i32_0 : i32, i32
  }
  func.func @transform_8(%arg0: i32) -> (i32, i32) {
    %c0_i32 = arith.constant 0 : i32
    %c0_i32_0 = arith.constant 0 : i32
    return %c0_i32, %arg0 : i32, i32
  }
}

</mosaic_0001>

<llo_original>
// kernel: tpu_custom_call.1
$region0: #{tpu_custom_call.1}
  #allocation0 [shape = 'u32[]', space=smem, size = 0x4, offset = 0x4, fixed_abs, tag = 'smem constant byte address 0x4 - core index']
  #allocation1 [shape = 'u32[144,128]{1,0:T(1,128)}', space=vmem, size = 0x12000, scoped, tag = 'internal scratch']
  %s0 = inlined_call_operand.vmem [shape: bf16[16,128], index: 0, kind: input, shape index: {}]
  %s1 = inlined_call_operand.vmem [shape: bf16[32,16], index: 1, kind: input, shape index: {}]
  %s2 = inlined_call_operand.vmem [shape: f32[32,1], index: 2, kind: input, shape index: {}]
  %s3 = inlined_call_operand.vmem [shape: bf16[8,32], index: 3, kind: input, shape index: {}]
  %s4 = inlined_call_operand.vmem [shape: f32[8,1], index: 4, kind: input, shape index: {}]
  %s5 = inlined_call_operand.vmem [shape: bf16[4,128], index: 5, kind: input, shape index: {}]
  %s6 = inlined_call_operand.vmem [shape: f32[4,1], index: 6, kind: input, shape index: {}]
  %s7 = inlined_call_operand.vmem [shape: f32[4,1], index: 7, kind: input, shape index: {}]
  %s8 = inlined_call_operand.hbm [shape: f32[8,128], index: 8, kind: output, shape index: {}]
  %s9 = sld [smem:[#allocation0]]
  $region42: #{tpu_custom_call.1} parent=0
    _
  %s11 = ssub.s32 1, %s9
  %s12 = scalar_select 0, %s11, %s9
  $region1: #{tpu_custom_call.1} parent=0
    #allocation2 [shape = 'u8[4096]{0}', space=vmem, size = 0x1000, scoped, tag = 'output window, operand 0, single buffered']
    #allocation3 [shape = 's32[1]{0}', space=sflag, size = 0x4, scoped, tag = 'scoped memory for tpu_custom_call.1']
    %13 = vsyncpa [#allocation3], 0
    // Predicated region
    $region2: #{tpu_custom_call.1} parent=1 // pred_check
      _
    $region3: #{tpu_custom_call.1} parent=1 // pred_check_branch
      %15 = sbr.rel (0) target = $region5
    $region4: #{tpu_custom_call.1} parent=1 // pred_region
      _
    $region5: #{tpu_custom_call.1} parent=1 // pred_fallthru
      _
    // Predicated region
    $region6: #{tpu_custom_call.1} parent=1 // pred_check
      _
    $region7: #{tpu_custom_call.1} parent=1 // pred_check_branch
      %17 = sbr.rel (0) target = $region9
    $region8: #{tpu_custom_call.1} parent=1 // pred_region
      _
    $region9: #{tpu_custom_call.1} parent=1 // pred_fallthru
      _
    // Predicated region
    $region10: #{tpu_custom_call.1} parent=1 // pred_check
      _
    $region11: #{tpu_custom_call.1} parent=1 // pred_check_branch
      %19 = sbr.rel (0) target = $region13
    $region12: #{tpu_custom_call.1} parent=1 // pred_region
      _
    $region13: #{tpu_custom_call.1} parent=1 // pred_fallthru
      _
    // Predicated region
    $region14: #{tpu_custom_call.1} parent=1 // pred_check
      _
    $region15: #{tpu_custom_call.1} parent=1 // pred_check_branch
      %21 = sbr.rel (0) target = $region17
    $region16: #{tpu_custom_call.1} parent=1 // pred_region
      _
    $region17: #{tpu_custom_call.1} parent=1 // pred_fallthru
      _
    // Predicated region
    $region18: #{tpu_custom_call.1} parent=1 // pred_check
      _
    $region19: #{tpu_custom_call.1} parent=1 // pred_check_branch
      %23 = sbr.rel (0) target = $region21
    $region20: #{tpu_custom_call.1} parent=1 // pred_region
      _
    $region21: #{tpu_custom_call.1} parent=1 // pred_fallthru
      _
    // Predicated region
    $region22: #{tpu_custom_call.1} parent=1 // pred_check
      _
    $region23: #{tpu_custom_call.1} parent=1 // pred_check_branch
      %25 = sbr.rel (0) target = $region25
    $region24: #{tpu_custom_call.1} parent=1 // pred_region
      _
    $region25: #{tpu_custom_call.1} parent=1 // pred_fallthru
      _
    // Predicated region
    $region26: #{tpu_custom_call.1} parent=1 // pred_check
      _
    $region27: #{tpu_custom_call.1} parent=1 // pred_check_branch
      %27 = sbr.rel (0) target = $region29
    $region28: #{tpu_custom_call.1} parent=1 // pred_region
      _
    $region29: #{tpu_custom_call.1} parent=1 // pred_fallthru
      _
    // Predicated region
    $region30: #{tpu_custom_call.1} parent=1 // pred_check
      _
    $region31: #{tpu_custom_call.1} parent=1 // pred_check_branch
      %29 = sbr.rel (0) target = $region33
    $region32: #{tpu_custom_call.1} parent=1 // pred_region
      _
    $region33: #{tpu_custom_call.1} parent=1 // pred_fallthru
      _
    %v31 = vld [vmem:[%s1] sm:$0xf]
    %v32 = vld [vmem:[%s1 + $0x4] sm:$0xf]
    %v33 = vld [vmem:[%s1 + $0x8] sm:$0xf]
    %v34 = vld [vmem:[%s1 + $0xc] sm:$0xf]
    %v35 = vld [vmem:[%s0] sm:$0xf]
    %v36 = vld [vmem:[%s0 + $0x4] sm:$0xf]
    %v37 = vld [vmem:[%s2] sm:$0xff]
    %v38 = vld [vmem:[%s2 + $0x8] sm:$0xff]
    %v39 = vld [vmem:[%s2 + $0x10] sm:$0xff]
    %v40 = vld [vmem:[%s2 + $0x18] sm:$0xff]
    %42 = vset.pattern.permute.xlu0 0
    %43 = vperm.xlu0 %42, %v37
    %v44 = vpop.permute.xlu0 %43
    %47 = vset.pattern.permute.xlu0 0
    %48 = vperm.xlu0 %47, %v38
    %v49 = vpop.permute.xlu0 %48
    %52 = vset.pattern.permute.xlu0 0
    %53 = vperm.xlu0 %52, %v39
    %v54 = vpop.permute.xlu0 %53
    %57 = vset.pattern.permute.xlu0 0
    %58 = vperm.xlu0 %57, %v40
    %v59 = vpop.permute.xlu0 %58
    %v65 = vunpack.c.l.b16 %v31
    %v66 = vunpack.c.l.b16 %v32
    %v67 = vunpack.c.l.b16 %v33
    %v68 = vunpack.c.l.b16 %v34
    %v69 = vpack.c.b16 %v66, %v65
    %v70 = vpack.c.b16 %v68, %v67
    %v73 = vunpack.c.l.b16 %v35
    %v74 = vunpack.c.l.b16 %v36
    %v75 = vpack.c.b16 %v74, %v73
    %vm77 = vcmask 130048
    %v79 = vsel %vm77, %v69, 0
    %v82 = vsel %vm77, %v70, 0
    %84 = vmatprep.subr.bf16.mxu0 0
    %85 = vmatpush1.bf16.msra.mxu0 %v75
    %86 = vmatprep.subr.bf16.mxu0 0
    %87 = vmatpush1.bf16.msra.mxu0 0
    %88 = vmatprep.subr.bf16.mxu0 0
    %89 = vmatpush1.bf16.msra.mxu0 0
    %90 = vmatprep.subr.bf16.mxu0 0
    %91 = vmatpush1.bf16.msra.mxu0 0
    %92 = vmatprep.subr.bf16.mxu0 0
    %93 = vmatpush1.bf16.msra.mxu0 0
    %94 = vmatprep.subr.bf16.mxu0 0
    %95 = vmatpush1.bf16.msra.mxu0 0
    %96 = vmatprep.subr.bf16.mxu0 0
    %97 = vmatpush1.bf16.msra.mxu0 0
    %98 = vmatprep.subr.bf16.mxu0 0
    %99 = vmatpush1.bf16.msra.mxu0 0
    %100 = vmatprep.subr.bf16.mxu0 0
    %101 = vmatpush1.bf16.msra.mxu0 0
    %102 = vmatprep.subr.bf16.mxu0 0
    %103 = vmatpush1.bf16.msra.mxu0 0
    %104 = vmatprep.subr.bf16.mxu0 0
    %105 = vmatpush1.bf16.msra.mxu0 0
    %106 = vmatprep.subr.bf16.mxu0 0
    %107 = vmatpush1.bf16.msra.mxu0 0
    %108 = vmatprep.subr.bf16.mxu0 0
    %109 = vmatpush1.bf16.msra.mxu0 0
    %110 = vmatprep.subr.bf16.mxu0 0
    %111 = vmatpush1.bf16.msra.mxu0 0
    %112 = vmatprep.subr.bf16.mxu0 0
    %113 = vmatpush1.bf16.msra.mxu0 0
    %114 = vmatprep.subr.bf16.mxu0 0
    %115 = vmatpush1.bf16.msra.mxu0 0
    %116 = vmatprep.mubr.bf16.mxu0 0
    %117 = vmatmul.mubr.bf16.gmra.mrb[0].mxu0 %v79
    %v118 = vpop.f32.mrb[0].mxu0
    %v119 = vadd.f32 %v44, %v118
    %v120 = vpop.f32.mrb[0].mxu0
    %v121 = vpop.f32.mrb[0].mxu0
    %v122 = vadd.f32 %v49, %v121
    %v123 = vpop.f32.mrb[0].mxu0
    %124 = vmatprep.mubr.bf16.mxu0 0
    %125 = vmatmul.mubr.bf16.gmra.mrb[0].mxu0 %v82
    %v126 = vpop.f32.mrb[0].mxu0
    %v127 = vadd.f32 %v54, %v126
    %v128 = vpop.f32.mrb[0].mxu0
    %v129 = vpop.f32.mrb[0].mxu0
    %v130 = vadd.f32 %v59, %v129
    %v131 = vpop.f32.mrb[0].mxu0
    %132 = vdwg.mxu0
    %v133 = vmax.f32 %v119, 0.0
    %v134 = vmax.f32 %v122, 0.0
    %v135 = vmax.f32 %v127, 0.0
    %v136 = vmax.f32 %v130, 0.0
    %v137 = vld [vmem:[%s3] sm:$0xf]
    %v138 = vpack.c.bf16 %v134, %v133
    %v139 = vpack.c.bf16 %v136, %v135
    %v140 = vld [vmem:[%s4] sm:$0xff]
    %142 = vset.pattern.permute.xlu0 0
    %143 = vperm.xlu0 %142, %v140
    %v144 = vpop.permute.xlu0 %143
    %vm146 = vcmask 261120
    %v148 = vsel %vm146, %v137, 0
    %150 = vmatprep.subr.bf16.mxu0 0
    %151 = vmatpush1.bf16.msra.mxu0 %v138
    %152 = vmatprep.subr.bf16.mxu0 0
    %153 = vmatpush1.bf16.msra.mxu0 %v139
    %154 = vmatprep.subr.bf16.mxu0 0
    %155 = vmatpush1.bf16.msra.mxu0 0
    %156 = vmatprep.subr.bf16.mxu0 0
    %157 = vmatpush1.bf16.msra.mxu0 0
    %158 = vmatprep.subr.bf16.mxu0 0
    %159 = vmatpush1.bf16.msra.mxu0 0
    %160 = vmatprep.subr.bf16.mxu0 0
    %161 = vmatpush1.bf16.msra.mxu0 0
    %162 = vmatprep.subr.bf16.mxu0 0
    %163 = vmatpush1.bf16.msra.mxu0 0
    %164 = vmatprep.subr.bf16.mxu0 0
    %165 = vmatpush1.bf16.msra.mxu0 0
    %166 = vmatprep.subr.bf16.mxu0 0
    %167 = vmatpush1.bf16.msra.mxu0 0
    %168 = vmatprep.subr.bf16.mxu0 0
    %169 = vmatpush1.bf16.msra.mxu0 0
    %170 = vmatprep.subr.bf16.mxu0 0
    %171 = vmatpush1.bf16.msra.mxu0 0
    %172 = vmatprep.subr.bf16.mxu0 0
    %173 = vmatpush1.bf16.msra.mxu0 0
    %174 = vmatprep.subr.bf16.mxu0 0
    %175 = vmatpush1.bf16.msra.mxu0 0
    %176 = vmatprep.subr.bf16.mxu0 0
    %177 = vmatpush1.bf16.msra.mxu0 0
    %178 = vmatprep.subr.bf16.mxu0 0
    %179 = vmatpush1.bf16.msra.mxu0 0
    %180 = vmatprep.subr.bf16.mxu0 0
    %181 = vmatpush1.bf16.msra.mxu0 0
    %182 = vmatprep.mubr.bf16.mxu0 0
    %183 = vmatmul.mubr.bf16.gmra.mrb[0].mxu0 %v148
    %v184 = vpop.f32.mrb[0].mxu0
    %v185 = vadd.f32 %v144, %v184
    %v186 = vpop.f32.mrb[0].mxu0
    %v187 = vpop.f32.mrb[0].mxu0
    %v188 = vpop.f32.mrb[0].mxu0
    %189 = vdwg.mxu0
    %v190 = vtanh.pop %v185
    %v191 = vmax.f32 %v185, -5.0
    %v192 = vmin.f32 %v191, 2.0
    %v193 = vmul.f32 %v192, 1.442695
    %v194 = vpow.pop %v193
    %v195 = vadd.f32 %v194, 1.0
    %v196 = vlog2.pop %v195
    %v197 = vmul.f32 %v196, 0.6931472
    %v198 = vmul.f32 -0.5, %v194
    %v199 = vadd.f32 %v198, 1.0
    %v200 = vmul.f32 %v199, %v194
    %v201 = vand.u32 2147483647, %v194
    %vm202 = vcmp.lt.f32.partialorder %v201, 0.0004427343
    %v203 = vsel %vm202, %v200, %v197
    %v204 = vadd.f32 %v203, 1e-06
    %v205 = vld [vmem:[%s5] sm:$0x3]
    %v206 = vunpack.c.l.bf16 %v205
    %v208 = vcombine.low %v206, %v206
    %v210 = vmul.f32 %v204, %v208
    %v212 = vrot.slane %v210, 4
    %v214 = vadd.f32 %v190, %v212
    %v215 = vtanh.pop %v214
    %v216 = vmul.f32 %v206, -0.5
    %v217 = vmul.f32 %v216, %v206
    %v218 = vlog2.pop %v204
    %v219 = vmul.f32 %v218, 0.6931472
    %v221 = vcombine.high %v219, %v219
    %v223 = vsub.f32 %v217, %v221
    %v224 = vsub.f32 %v223, 0.9189385
    %v225 = vmul.f32 %v215, %v215
    %v226 = vsub.f32 1.0, %v225
    %v227 = vadd.f32 %v226, 1e-06
    %v228 = vlog2.pop %v227
    %v229 = vmul.f32 %v228, 0.6931472
    %v230 = vsub.f32 %v224, %v229
    %v231 = vadd.f32 %v215, 1.0
    %v232 = vld [vmem:[%s6] sm:$0xf]
    %234 = vset.pattern.permute.xlu0 0
    %235 = vperm.xlu0 %234, %v232
    %v236 = vpop.permute.xlu0 %235
    %v238 = vmul.f32 %v231, %v236
    %v239 = vld [vmem:[%s7] sm:$0xf]
    %241 = vset.pattern.permute.xlu0 0
    %242 = vperm.xlu0 %241, %v239
    %v243 = vpop.permute.xlu0 %242
    %v245 = vadd.f32 %v238, %v243
    %246 = vst [vmem:[#allocation2] sm:$0xf] %v245
    %247 = vst [vmem:[#allocation2 + $0x4] sm:$0xf] %v230
    // Predicated region
    $region34: #{tpu_custom_call.1} parent=1 // pred_check
      _
    $region35: #{tpu_custom_call.1} parent=1 // pred_check_branch
      %249 = sbr.rel (0) target = $region37
    $region36: #{tpu_custom_call.1} parent=1 // pred_region
      %s251 = ssub.s32 128, 128
      %252 = vsyncadd [#allocation3], %s251
      %s254 = sshll.u32 [#allocation2], 4
      %s255 = int_to_ptr.vmem [resolvable:$true] %s254
      %257 = dma.vmem_to_hbm [thread:$0]  %s255, 128, %s8, [#allocation3]
    $region37: #{tpu_custom_call.1} parent=1 // pred_fallthru
      _
    // Predicated region
    $region38: #{tpu_custom_call.1} parent=1 // pred_check
      _
    $region39: #{tpu_custom_call.1} parent=1 // pred_check_branch
      %259 = sbr.rel (0) target = $region41
    $region40: #{tpu_custom_call.1} parent=1 // pred_region
      %260 = dma.done [#allocation3], 128
    $region41: #{tpu_custom_call.1} parent=1 // pred_fallthru
      _
    %261 = vsyncpa [#allocation3], 1

</llo_original>
